<compile_context>
chip_gen: v7x
topology: tpu7x:2x2x1
jax: 0.10.0
libtpu: 0.0.40
codegen_flags: <defaults>
</compile_context>

<pallas_src>
import math
import jax
import jax.numpy as jnp
from jax.experimental import pallas as pl
from jax.experimental.pallas import tpu as pltpu


def _round_up(x, m):
    return ((x + m - 1) // m) * m


def rgc_kernel(a_ref, v_ref, o_ref, acc_ref):
    # a_ref: (tm, tk) bf16, v_ref: (tk, Hp) bf16, o_ref: (tm, Hp) f32, acc_ref: (tm, Hp) f32
    @pl.when(pl.program_id(1) == 0)
    def _init():
        acc_ref[...] = jnp.zeros_like(acc_ref)

    acc_ref[...] += jnp.dot(a_ref[...], v_ref[...], preferred_element_type=jnp.float32)

    @pl.when(pl.program_id(1) == pl.num_programs(1) - 1)
    def _finalize():
        o_ref[...] = jnp.maximum(acc_ref[...], 0.0).astype(o_ref.dtype)  # nn.ReLU


def rgc_forward(supports, V, rowscale=None, *, tm=256, tk=512,
                compute_dtype=jnp.bfloat16):
    """out = relu(supports @ V) [* rowscale], tiled over rows (parallel) and K (reduction)."""
    N, K = supports.shape
    K2, H = V.shape
    assert K == K2

    # Lane-dense output (multiple of 128); adaptive tiles for small problems.
    Hp = _round_up(H, 128)
    tm = min(tm, _round_up(N, 8))
    tk = min(tk, _round_up(K, 128))
    Np = _round_up(N, tm)
    Kp = _round_up(K, tk)

    # Zero padding is exact: padded columns/rows contribute 0 to the matmul, ReLU(0)=0.
    a = jnp.pad(supports, ((0, Np - N), (0, Kp - K))).astype(compute_dtype)
    v = jnp.pad(V, ((0, Kp - K), (0, Hp - H))).astype(compute_dtype)

    cost = pl.CostEstimate(
        flops=2 * Np * Kp * Hp,
        transcendentals=0,
        bytes_accessed=Np * Kp * 2 + Kp * Hp * 2 + Np * Hp * 4,
    )

    out = pl.pallas_call(
        rgc_kernel,
        out_shape=jax.ShapeDtypeStruct((Np, Hp), jnp.float32),
        grid=(Np // tm, Kp // tk),
        in_specs=[
            pl.BlockSpec((tm, tk), lambda i, k: (i, k)),   # supports tile
            pl.BlockSpec((tk, Hp), lambda i, k: (k, 0)),   # V tile (K-tiled, not fully resident)
        ],
        out_specs=pl.BlockSpec((tm, Hp), lambda i, k: (i, 0)),
        scratch_shapes=[pltpu.VMEM((tm, Hp), jnp.float32)],
        compiler_params=pltpu.CompilerParams(
            dimension_semantics=("parallel", "arbitrary"),
        ),
        cost_estimate=cost,
    )(a, v)

    out = out[:N, :H]
    if rowscale is not None:
        # Featureless dropout scale is >= 0 (0 or 1/(1-p)), so applying it after the
        # in-kernel ReLU is exactly equivalent to the original ReLU(scale * x).
        out = out * rowscale
    return out


def xavier_uniform(key, shape):
    fan_in, fan_out = shape[0], shape[1]
    bound = math.sqrt(6.0 / (fan_in + fan_out))
    return jax.random.uniform(key, shape, jnp.float32, minval=-bound, maxval=bound)


def make_params(key, input_dim, h_dim, support, num_bases):
    kW, kWc = jax.random.split(key)
    W = xavier_uniform(kW, (input_dim * num_bases, h_dim))        # nn.init.xavier_uniform_
    W_comp = xavier_uniform(kWc, (support, num_bases))
    return W, W_comp


def build_V(W, W_comp, input_dim, h_dim, support, num_bases):
    # V = matmul(W_comp, W.reshape(B, D, H).permute(1, 0, 2)).reshape(S*D, H)
    W3 = W.reshape(num_bases, input_dim, h_dim)                   # (B, D, H)
    V = jnp.einsum("sb,bdh->dsh", W_comp, W3)                     # (D, S, H) broadcast matmul
    return V.reshape(support * input_dim, h_dim)                  # row = d*S + s (exact torch reshape)


if __name__ == "__main__":
    # Small shapes consistent with the module (featureless RGCN: num_nodes == input_dim).
    input_dim = 16     # == num_nodes N
    h_dim = 32
    support = 4
    num_bases = 2
    N = input_dim

    key = jax.random.PRNGKey(0)
    k_param, k_adj = jax.random.split(key)

    W, W_comp = make_params(k_param, input_dim, h_dim, support, num_bases)

    # Dense stand-in for the list of sparse adjacency matrices A[s] of shape (N, input_dim).
    # TODO(synk): torch.sparse spmm has no Pallas sparse equivalent; adjacencies are densified
    #             (per-relation nonzero-block skipping via PrefetchScalarGridSpec is a follow-up).
    A_raw = jax.random.uniform(k_adj, (support, N, input_dim), jnp.float32)
    A = jnp.where(A_raw > 0.7, A_raw, 0.0)                        # sparse-ish relational adjacencies

    # supports = torch.cat([A_0, ..., A_{S-1}], dim=1)  -> (N, S*D), support-major columns.
    supports = jnp.concatenate([A[s] for s in range(support)], axis=1)

    V = build_V(W, W_comp, input_dim, h_dim, support, num_bases)

    # Inference path: dropout(ones(N)) == ones -> no rowscale input (DMA-free).
    out = rgc_forward(supports, V)
    out = jax.block_until_ready(out)

    # Pure-JAX f32 reference for the same forward pass (kernel computes in bf16 w/ f32 accum).
    ref = jnp.maximum(supports @ V, 0.0)
    assert out.shape == (N, h_dim)
    assert jnp.allclose(out, ref, atol=1e-2, rtol=2e-2), "mismatch vs f32 reference"

    print("KERNEL_OK")
</pallas_src>

<mosaic_0001>
module attributes {stable_mosaic.version = 11 : i64} {
  func.func @rgc_kernel(%arg0: i32, %arg1: i32, %arg2: memref<16x128xbf16, #tpu.memory_space<vmem>>, %arg3: memref<128x128xbf16, #tpu.memory_space<vmem>>, %arg4: memref<16x128xf32, #tpu.memory_space<vmem>>, %arg5: memref<16x128xf32, #tpu.memory_space<vmem>>) attributes {dimension_semantics = [#tpu.dimension_semantics<parallel>, #tpu.dimension_semantics<arbitrary>], iteration_bounds = array<i64: 1, 1>, scalar_prefetch = 0 : i64, scratch_operands = 1 : i64, tpu.core_type = #tpu.core_type<tc>, window_params = [{transform_indices = @transform_0, window_bounds = array<i64: 16, 128>}, {transform_indices = @transform_1, window_bounds = array<i64: 128, 128>}, {transform_indices = @transform_2, window_bounds = array<i64: 16, 128>}]} {
    %c0_i32 = arith.constant 0 : i32
    %0 = arith.cmpi eq, %arg1, %c0_i32 : i32
    %1 = arith.extui %0 : i1 to i32
    %c0_i32_0 = arith.constant 0 : i32
    %2 = arith.cmpi ne, %1, %c0_i32_0 : i32
    scf.if %2 {
      %cst_10 = arith.constant 0.000000e+00 : f32
      %12 = vector.broadcast %cst_10 : f32 to vector<16x128xf32>
      %c0_11 = arith.constant 0 : index
      %c0_12 = arith.constant 0 : index
      %13 = vector.load %arg5[%c0_11, %c0_12] : memref<16x128xf32, #tpu.memory_space<vmem>>, vector<16x128xf32>
      tpu.vector_store %arg5[%c0_11, %c0_12], %12 {strides = array<i32>} : memref<16x128xf32, #tpu.memory_space<vmem>>, vector<16x128xf32>,
    } else {
    }
    %c0 = arith.constant 0 : index
    %c0_1 = arith.constant 0 : index
    %3 = vector.load %arg5[%c0, %c0_1] : memref<16x128xf32, #tpu.memory_space<vmem>>, vector<16x128xf32>
    %c0_2 = arith.constant 0 : index
    %c0_3 = arith.constant 0 : index
    %4 = vector.load %arg2[%c0_2, %c0_3] : memref<16x128xbf16, #tpu.memory_space<vmem>>, vector<16x128xbf16>
    %c0_4 = arith.constant 0 : index
    %c0_5 = arith.constant 0 : index
    %5 = vector.load %arg3[%c0_4, %c0_5] : memref<128x128xbf16, #tpu.memory_space<vmem>>, vector<128x128xbf16>
    %cst = arith.constant dense<0.000000e+00> : vector<16x128xf32>
    %6 = tpu.matmul %4, %5, %cst {dimension_numbers = #tpu.dot_dimension_numbers<[1], [0], [0], [1], [0, 0, 1, 1], [], []>} : vector<16x128xbf16>, vector<128x128xbf16>, vector<16x128xf32> -> vector<16x128xf32>
    %7 = arith.addf %3, %6 : vector<16x128xf32>
    %c0_6 = arith.constant 0 : index
    %c0_7 = arith.constant 0 : index
    %8 = vector.load %arg5[%c0_6, %c0_7] : memref<16x128xf32, #tpu.memory_space<vmem>>, vector<16x128xf32>
    tpu.vector_store %arg5[%c0_6, %c0_7], %7 {strides = array<i32>} : memref<16x128xf32, #tpu.memory_space<vmem>>, vector<16x128xf32>,
    %c0_i32_8 = arith.constant 0 : i32
    %9 = arith.cmpi eq, %arg1, %c0_i32_8 : i32
    %10 = arith.extui %9 : i1 to i32
    %c0_i32_9 = arith.constant 0 : i32
    %11 = arith.cmpi ne, %10, %c0_i32_9 : i32
    scf.if %11 {
      %c0_10 = arith.constant 0 : index
      %c0_11 = arith.constant 0 : index
      %12 = vector.load %arg5[%c0_10, %c0_11] : memref<16x128xf32, #tpu.memory_space<vmem>>, vector<16x128xf32>
      %cst_12 = arith.constant 0.000000e+00 : f32
      %13 = vector.broadcast %cst_12 : f32 to vector<16x128xf32>
      %14 = arith.maximumf %12, %13 : vector<16x128xf32>
      %c0_13 = arith.constant 0 : index
      %c0_14 = arith.constant 0 : index
      %15 = vector.load %arg4[%c0_13, %c0_14] : memref<16x128xf32, #tpu.memory_space<vmem>>, vector<16x128xf32>
      tpu.vector_store %arg4[%c0_13, %c0_14], %14 {strides = array<i32>} : memref<16x128xf32, #tpu.memory_space<vmem>>, vector<16x128xf32>,
    } else {
    }
    return
  }
  func.func @transform_0(%arg0: i32, %arg1: i32) -> (i32, i32) {
    %c0_i32 = arith.constant 0 : i32
    return %arg0, %arg1 : i32, i32
  }
  func.func @transform_1(%arg0: i32, %arg1: i32) -> (i32, i32) {
    %c0_i32 = arith.constant 0 : i32
    %c0_i32_0 = arith.constant 0 : i32
    return %arg1, %c0_i32 : i32, i32
  }
  func.func @transform_2(%arg0: i32, %arg1: i32) -> (i32, i32) {
    %c0_i32 = arith.constant 0 : i32
    %c0_i32_0 = arith.constant 0 : i32
    return %arg0, %c0_i32 : i32, i32
  }
}

</mosaic_0001>

<llo_original>
// kernel: tpu_custom_call.1
$region0: #{tpu_custom_call.1}
  #allocation0 [shape = 'u32[]', space=smem, size = 0x4, offset = 0x4, fixed_abs, tag = 'smem constant byte address 0x4 - core index']
  #allocation1 [shape = 'u32[144,128]{1,0:T(1,128)}', space=vmem, size = 0x12000, scoped, tag = 'internal scratch']
  #allocation2 [shape = 'f32[16,128]{1,0:T(8,128)}', space=vmem, size = 0x2000, scoped, tag = 'scratch operand']
  %s0 = inlined_call_operand.hbm [shape: bf16[16,128], index: 0, kind: input, shape index: {}]
  %s1 = inlined_call_operand.hbm [shape: bf16[128,128], index: 1, kind: input, shape index: {}]
  %s2 = inlined_call_operand.hbm [shape: f32[16,128], index: 2, kind: output, shape index: {}]
  %s3 = sld [smem:[#allocation0]]
  $region34: #{tpu_custom_call.1} parent=0
    _
  %s5 = ssub.s32 1, %s3
  %s6 = scalar_select 0, %s5, %s3
  $region1: #{tpu_custom_call.1} parent=0
    #allocation3 [shape = 'u8[4096]{0}', space=vmem, size = 0x1000, scoped, tag = 'input window, operand 0, single buffered']
    #allocation4 [shape = 's32[1]{0}', space=sflag, size = 0x4, scoped, tag = 'scoped memory for tpu_custom_call.1']
    #allocation5 [shape = 's32[1]{0}', space=sflag, size = 0x4, scoped, tag = 'scoped memory for tpu_custom_call.1']
    #allocation6 [shape = 'u8[32768]{0}', space=vmem, size = 0x8000, scoped, tag = 'input window, operand 1, single buffered']
    #allocation7 [shape = 's32[1]{0}', space=sflag, size = 0x4, scoped, tag = 'scoped memory for tpu_custom_call.1']
    #allocation8 [shape = 'u8[8192]{0}', space=vmem, size = 0x2000, scoped, tag = 'output window, operand 0, single buffered']
    %7 = vsyncpa [#allocation4], 0
    %8 = vsyncpa [#allocation7], 0
    %9 = vsyncpa [#allocation5], 0
    // Predicated region
    $region2: #{tpu_custom_call.1} parent=1 // pred_check
      _
    $region3: #{tpu_custom_call.1} parent=1 // pred_check_branch
      %11 = sbr.rel (0) target = $region5
    $region4: #{tpu_custom_call.1} parent=1 // pred_region
      %s13 = ssub.s32 128, 128
      %14 = vsyncadd [#allocation4], %s13
      %s15 = sshll.u32 [#allocation3], 4
      %s16 = int_to_ptr.vmem [resolvable:$true] %s15
      %21 = dma.hbm_to_vmem [thread:$0]  %s0, 128, %s16, [#allocation4], 64, 64, 4
    $region5: #{tpu_custom_call.1} parent=1 // pred_fallthru
      _
    // Predicated region
    $region6: #{tpu_custom_call.1} parent=1 // pred_check
      _
    $region7: #{tpu_custom_call.1} parent=1 // pred_check_branch
      %23 = sbr.rel (0) target = $region9
    $region8: #{tpu_custom_call.1} parent=1 // pred_region
      %s25 = ssub.s32 1024, 1024
      %26 = vsyncadd [#allocation7], %s25
      %s27 = sshll.u32 [#allocation6], 4
      %s28 = int_to_ptr.vmem [resolvable:$true] %s27
      %33 = dma.hbm_to_vmem [thread:$0]  %s1, 1024, %s28, [#allocation7], 64, 64, 4
    $region9: #{tpu_custom_call.1} parent=1 // pred_fallthru
      _
    // Predicated region
    $region10: #{tpu_custom_call.1} parent=1 // pred_check
      _
    $region11: #{tpu_custom_call.1} parent=1 // pred_check_branch
      %35 = sbr.rel (0) target = $region13
    $region12: #{tpu_custom_call.1} parent=1 // pred_region
      %36 = dma.done [#allocation4], 128
    $region13: #{tpu_custom_call.1} parent=1 // pred_fallthru
      _
    // Predicated region
    $region14: #{tpu_custom_call.1} parent=1 // pred_check
      _
    $region15: #{tpu_custom_call.1} parent=1 // pred_check_branch
      %38 = sbr.rel (0) target = $region17
    $region16: #{tpu_custom_call.1} parent=1 // pred_region
      %39 = dma.done [#allocation7], 1024
    $region17: #{tpu_custom_call.1} parent=1 // pred_fallthru
      _
    %p41 = scmp.eq.s32.totalorder 0, 0
    // Predicated region
    $region18: #{tpu_custom_call.1} parent=1 // pred_check
      %p42 = pneg %p41
    $region19: #{tpu_custom_call.1} parent=1 // pred_check_branch
      %44 = sbr.rel (%p42) target = $region21
    $region20: #{tpu_custom_call.1} parent=1 // pred_region
      %45 = vst [vmem:[#allocation2] sm:$0xff] 0.0
      %46 = vst [vmem:[#allocation2 + $0x8] sm:$0xff] 0.0
    $region21: #{tpu_custom_call.1} parent=1 // pred_fallthru
      _
    %v47 = vld [vmem:[#allocation2] sm:$0xff]
    %v48 = vld [vmem:[#allocation2 + $0x8] sm:$0xff]
    %v49 = vld [vmem:[#allocation3] sm:$0xf]
    %v50 = vld [vmem:[#allocation3 + $0x4] sm:$0xf]
    %v51 = vld [vmem:[#allocation6] sm:$0xf]
    %v52 = vld [vmem:[#allocation6 + $0x4] sm:$0xf]
    %v53 = vld [vmem:[#allocation6 + $0x8] sm:$0xf]
    %v54 = vld [vmem:[#allocation6 + $0xc] sm:$0xf]
    %v55 = vld [vmem:[#allocation6 + $0x10] sm:$0xf]
    %v56 = vld [vmem:[#allocation6 + $0x14] sm:$0xf]
    %v57 = vld [vmem:[#allocation6 + $0x18] sm:$0xf]
    %v58 = vld [vmem:[#allocation6 + $0x1c] sm:$0xf]
    %v59 = vld [vmem:[#allocation6 + $0x20] sm:$0xf]
    %v60 = vld [vmem:[#allocation6 + $0x24] sm:$0xf]
    %v61 = vld [vmem:[#allocation6 + $0x28] sm:$0xf]
    %v62 = vld [vmem:[#allocation6 + $0x2c] sm:$0xf]
    %v63 = vld [vmem:[#allocation6 + $0x30] sm:$0xf]
    %v64 = vld [vmem:[#allocation6 + $0x34] sm:$0xf]
    %v65 = vld [vmem:[#allocation6 + $0x38] sm:$0xf]
    %v66 = vld [vmem:[#allocation6 + $0x3c] sm:$0xf]
    %v69 = vunpack.c.l.b16 %v49
    %v70 = vunpack.c.l.b16 %v50
    %v71 = vpack.c.b16 %v70, %v69
    %v89 = vunpack.c.l.b16 %v51
    %v90 = vunpack.c.l.b16 %v52
    %v91 = vunpack.c.l.b16 %v53
    %v92 = vunpack.c.l.b16 %v54
    %v93 = vunpack.c.l.b16 %v55
    %v94 = vunpack.c.l.b16 %v56
    %v95 = vunpack.c.l.b16 %v57
    %v96 = vunpack.c.l.b16 %v58
    %v97 = vunpack.c.l.b16 %v59
    %v98 = vunpack.c.l.b16 %v60
    %v99 = vunpack.c.l.b16 %v61
    %v100 = vunpack.c.l.b16 %v62
    %v101 = vunpack.c.l.b16 %v63
    %v102 = vunpack.c.l.b16 %v64
    %v103 = vunpack.c.l.b16 %v65
    %v104 = vunpack.c.l.b16 %v66
    %v105 = vpack.c.b16 %v90, %v89
    %v106 = vpack.c.b16 %v92, %v91
    %v107 = vpack.c.b16 %v94, %v93
    %v108 = vpack.c.b16 %v96, %v95
    %v109 = vpack.c.b16 %v98, %v97
    %v110 = vpack.c.b16 %v100, %v99
    %v111 = vpack.c.b16 %v102, %v101
    %v112 = vpack.c.b16 %v104, %v103
    %121 = vmatprep.subr.bf16.mxu0 0
    %122 = vmatpush1.bf16.msra.mxu0 %v105
    %123 = vmatprep.subr.bf16.mxu0 0
    %124 = vmatpush1.bf16.msra.mxu0 %v106
    %125 = vmatprep.subr.bf16.mxu0 0
    %126 = vmatpush1.bf16.msra.mxu0 %v107
    %127 = vmatprep.subr.bf16.mxu0 0
    %128 = vmatpush1.bf16.msra.mxu0 %v108
    %129 = vmatprep.subr.bf16.mxu0 0
    %130 = vmatpush1.bf16.msra.mxu0 %v109
    %131 = vmatprep.subr.bf16.mxu0 0
    %132 = vmatpush1.bf16.msra.mxu0 %v110
    %133 = vmatprep.subr.bf16.mxu0 0
    %134 = vmatpush1.bf16.msra.mxu0 %v111
    %135 = vmatprep.subr.bf16.mxu0 0
    %136 = vmatpush1.bf16.msra.mxu0 %v112
    %137 = vmatprep.subr.bf16.mxu0 0
    %138 = vmatpush1.bf16.msra.mxu0 0
    %139 = vmatprep.subr.bf16.mxu0 0
    %140 = vmatpush1.bf16.msra.mxu0 0
    %141 = vmatprep.subr.bf16.mxu0 0
    %142 = vmatpush1.bf16.msra.mxu0 0
    %143 = vmatprep.subr.bf16.mxu0 0
    %144 = vmatpush1.bf16.msra.mxu0 0
    %145 = vmatprep.subr.bf16.mxu0 0
    %146 = vmatpush1.bf16.msra.mxu0 0
    %147 = vmatprep.subr.bf16.mxu0 0
    %148 = vmatpush1.bf16.msra.mxu0 0
    %149 = vmatprep.subr.bf16.mxu0 0
    %150 = vmatpush1.bf16.msra.mxu0 0
    %151 = vmatprep.subr.bf16.mxu0 0
    %152 = vmatpush1.bf16.msra.mxu0 0
    %153 = vmatprep.mubr.bf16.mxu0 0
    %154 = vmatmul.mubr.bf16.gmra.mrb[0].mxu0 %v71
    %v155 = vpop.f32.mrb[0].mxu0
    %v156 = vadd.f32 0.0, %v155
    %v157 = vpop.f32.mrb[0].mxu0
    %v158 = vpop.f32.mrb[0].mxu0
    %v159 = vadd.f32 0.0, %v158
    %v160 = vpop.f32.mrb[0].mxu0
    %161 = vdwg.mxu0
    %v162 = vadd.f32 %v47, %v156
    %v163 = vadd.f32 %v48, %v159
    %164 = vst [vmem:[#allocation2] sm:$0xff] %v162
    %165 = vst [vmem:[#allocation2 + $0x8] sm:$0xff] %v163
    // Predicated region
    $region22: #{tpu_custom_call.1} parent=1 // pred_check
      %p166 = pneg %p41
    $region23: #{tpu_custom_call.1} parent=1 // pred_check_branch
      %168 = sbr.rel (%p166) target = $region25
    $region24: #{tpu_custom_call.1} parent=1 // pred_region
      %v169 = vld [vmem:[#allocation2] sm:$0xff]
      %v170 = vld [vmem:[#allocation2 + $0x8] sm:$0xff]
      %v171 = vmax.f32 %v169, 0.0
      %v172 = vmax.f32 %v170, 0.0
      %173 = vst [vmem:[#allocation8] sm:$0xff] %v171
      %174 = vst [vmem:[#allocation8 + $0x8] sm:$0xff] %v172
    $region25: #{tpu_custom_call.1} parent=1 // pred_fallthru
      _
    // Predicated region
    $region26: #{tpu_custom_call.1} parent=1 // pred_check
      _
    $region27: #{tpu_custom_call.1} parent=1 // pred_check_branch
      %176 = sbr.rel (0) target = $region29
    $region28: #{tpu_custom_call.1} parent=1 // pred_region
      %s178 = ssub.s32 256, 256
      %179 = vsyncadd [#allocation5], %s178
      %s180 = sshll.u32 [#allocation8], 4
      %s181 = int_to_ptr.vmem [resolvable:$true] %s180
      %186 = dma.vmem_to_hbm [thread:$0]  %s181, 256, %s2, [#allocation5], 128, 128, 8
    $region29: #{tpu_custom_call.1} parent=1 // pred_fallthru
      _
    // Predicated region
    $region30: #{tpu_custom_call.1} parent=1 // pred_check
      _
    $region31: #{tpu_custom_call.1} parent=1 // pred_check_branch
      %188 = sbr.rel (0) target = $region33
    $region32: #{tpu_custom_call.1} parent=1 // pred_region
      %189 = dma.done [#allocation5], 256
    $region33: #{tpu_custom_call.1} parent=1 // pred_fallthru
      _
    %190 = vsyncpa [#allocation4], 1
    %191 = vsyncpa [#allocation7], 1
    %192 = vsyncpa [#allocation5], 1

</llo_original>
